<compile_context>
chip_gen: v5e
topology: v5e:2x2
jax: 0.10.0
libtpu: 0.0.40
codegen_flags: <defaults>
</compile_context>

<pallas_src>
import functools

import jax
import jax.numpy as jnp
from jax.experimental import pallas as pl
from jax.experimental.pallas import tpu as pltpu

_VMEM_LIMIT_BYTES = 32 << 20  # explicit scoped-VMEM limit, safe on v5e/v6e/v7x


def _combined_loss_kernel(logits_ref, labels_ref, out_ref, acc_ref, *,
                          num_classes, mask_invalid):
    """Grid = (B, n_par, tiles_per_par); innermost axis is the reduction.

    logits_ref : (1, C, TR, L)      logits tile (f32 or bf16)
    labels_ref : (1, TR, L)         int16 labels tile (-1 marks padded pixels)
    out_ref    : (1, 1, 2C+1, L)    per-(batch, half) partial sums (lane-dense)
    acc_ref    : (2C+1, TR, L)      f32 elementwise partial accumulators
    """
    t = pl.program_id(2)
    c = num_classes

    # TODO(synk): for num_classes >~ 10, chunk the class axis (two-pass /
    # online-softmax) to bound live vregs; not needed at the test's C=4.
    logits = logits_ref[0].astype(jnp.float32)          # (C, TR, L)
    labels = labels_ref[0].astype(jnp.int32)             # (TR, L)

    # Softmax over the leading class axis: elementwise VALU + EUP only.
    m = jnp.max(logits, axis=0, keepdims=True)            # (1, TR, L)
    shifted = logits - m                                    # (C, TR, L)
    e = jnp.exp(shifted)                                    # EUP
    denom = jnp.sum(e, axis=0, keepdims=True)               # (1, TR, L)
    p = e * pl.reciprocal(denom, approx=True)               # (C, TR, L)

    # One-hot targets (labels outside [0, C) contribute zero, as in v1).
    cls = jax.lax.broadcasted_iota(jnp.int32, (c, 1, 1), 0)
    oh = (labels[None, :, :] == cls).astype(jnp.float32)     # (C, TR, L)

    inter_t = p * oh                                          # (C, TR, L)
    # log p[target] as a single plane: sum_c onehot*shifted - log(denom).
    ce_t = jnp.sum(oh * shifted, axis=0, keepdims=True) - jnp.log(denom)
    if mask_invalid:
        valid = (labels >= 0).astype(jnp.float32)             # (TR, L)
        union_t = p * valid[None, :, :] + oh
        ce_t = ce_t * valid[None, :, :]
    else:
        union_t = p + oh                                      # (C, TR, L)

    @pl.when(t == 0)
    def _():                                                  # store, don't RMW
        acc_ref[0:c] = inter_t
        acc_ref[c:2 * c] = union_t
        acc_ref[2 * c:2 * c + 1] = ce_t

    @pl.when(t != 0)
    def _():
        acc_ref[0:c] += inter_t
        acc_ref[c:2 * c] += union_t
        acc_ref[2 * c:2 * c + 1] += ce_t

    @pl.when(t == pl.num_programs(2) - 1)
    def _():
        acc = acc_ref[...]                                    # (2C+1, TR, L)
        red_tr = jnp.sum(acc, axis=1)                         # (2C+1, L): dense VALU adds
        lane = acc.shape[-1]
        ones = jnp.ones((lane, lane), jnp.float32)
        # Lane-axis reduction on the otherwise idle MXU; every output lane
        # holds the same total, the wrapper reads lane 0.
        red = jnp.dot(red_tr, ones, preferred_element_type=jnp.float32)
        out_ref[...] = red[None, None]                        # (1, 1, 2C+1, L)


def _vmem_budget_bytes():
    """Conservative, generation-aware budget for the accounted tile footprint."""
    cap = None
    try:
        cap = getattr(pltpu.get_tpu_info(), "vmem_capacity_bytes", None)
    except Exception:
        cap = None
    if not cap:
        cap = 64 << 20  # assume the smallest per-core physical VMEM (v7x)
    # Stay well under the explicit 32 MiB scoped limit (and v5e's 16 MiB
    # default), leaving headroom for intermediates / spills / output buffers.
    return max(4 << 20, min(12 << 20, cap // 5))


def _ceil_div(a, b):
    return -(-a // b)


def _plan_tiling(hw, num_classes, logits_itemsize, labels_itemsize, budget):
    """Pick (lane, rows, tile_rows, n_pad_pixels) for the flattened pixel axis."""
    lane = 128
    c = num_classes
    # Sublane granularity: keep packed dtypes (bf16 logits / int16 labels) on
    # their native (16, 128) tile boundaries.
    sub = max(8, 32 // logits_itemsize, 32 // labels_itemsize)
    # Accounted VMEM per pixel: up to 3 pipeline buffers of logits, 2 of
    # labels, (2C+1) f32 accumulator planes, headroom for live temporaries.
    per_pixel = (3 * c * logits_itemsize + 2 * labels_itemsize
                 + (2 * c + 1) * 4 + 3 * c * 4)
    max_rows = max(sub, ((budget // per_pixel) // lane // sub) * sub)

    if hw % lane == 0:
        rows = hw // lane
        if rows <= max_rows:
            return lane, rows, rows, 0            # single full-extent tile
        tr = max_rows
        while tr >= sub and rows % tr != 0:
            tr -= sub
        if tr >= sub:
            return lane, rows, tr, 0
    # Fallback: pad the pixel axis so it splits into equal, sublane-aligned,
    # budget-sized tiles; padded pixels are masked in-kernel (label == -1).
    rows_raw = _ceil_div(hw, lane)
    n_tiles = max(1, _ceil_div(rows_raw, max_rows))
    tr = _ceil_div(_ceil_div(rows_raw, n_tiles), sub) * sub
    rows = n_tiles * tr
    return lane, rows, tr, rows * lane - hw


def combined_loss(preds, targets, *, alpha=0.5, smooth=1.0):
    """alpha * CrossEntropy(preds, targets) + (1-alpha) * DiceLoss(preds, targets).

    preds:   (B, C, H, W) float logits (f32 or bf16)
    targets: (B, H, W) integer class labels in [0, C)
    """
    b, c, h, w = preds.shape
    hw = h * w

    labels_dtype = jnp.int16   # class ids and the -1 pad sentinel always fit
    lane, rows, tr, n_pad = _plan_tiling(
        hw, c, preds.dtype.itemsize, jnp.dtype(labels_dtype).itemsize,
        _vmem_budget_bytes())

    logits = preds.reshape(b, c, hw)                    # free view of NCHW
    labels = targets.reshape(b, hw).astype(labels_dtype)
    if n_pad:
        # TODO(synk): padding costs one extra HBM pass over the logits; only
        # taken when H*W is not a multiple of 128.
        logits = jnp.pad(logits, ((0, 0), (0, 0), (0, n_pad)))
        labels = jnp.pad(labels, ((0, 0), (0, n_pad)), constant_values=-1)

    logits4 = logits.reshape(b, c, rows, lane)           # free views
    labels3 = labels.reshape(b, rows, lane)

    tiles = rows // tr
    n_par = 2 if tiles % 2 == 0 else 1    # megacore on v7x even for B == 1
    tiles_per_par = tiles // n_par

    def logits_map(bi, par, t):
        return (bi, 0, par * tiles_per_par + t, 0)

    def labels_map(bi, par, t):
        return (bi, par * tiles_per_par + t, 0)

    def out_map(bi, par, t):
        return (bi * n_par + par, 0, 0, 0)

    logits_spec = pl.BlockSpec((1, c, tr, lane), logits_map)
    if tiles_per_par >= 3:
        # Once mem-bound, deeper buffering on the dominant HBM stream.
        logits_spec = pl.BlockSpec((1, c, tr, lane), logits_map,
                                   pipeline_mode=pl.Buffered(3))

    kernel = functools.partial(_combined_loss_kernel, num_classes=c,
                               mask_invalid=bool(n_pad))

    partials = pl.pallas_call(
        kernel,
        out_shape=jax.ShapeDtypeStruct((b * n_par, 1, 2 * c + 1, lane),
                                       jnp.float32),
        grid_spec=pltpu.PrefetchScalarGridSpec(
            num_scalar_prefetch=0,
            grid=(b, n_par, tiles_per_par),
            in_specs=[
                logits_spec,
                pl.BlockSpec((1, tr, lane), labels_map),
            ],
            out_specs=pl.BlockSpec((1, 1, 2 * c + 1, lane), out_map),
            scratch_shapes=[pltpu.VMEM((2 * c + 1, tr, lane), jnp.float32)],
        ),
        compiler_params=pltpu.CompilerParams(
            dimension_semantics=("parallel", "parallel", "arbitrary"),
            vmem_limit_bytes=_VMEM_LIMIT_BYTES),
    )(logits4, labels3)

    # Tiny finalize in plain JAX: combine per-(batch, half) partials.
    sums = partials[:, 0, :, 0].sum(axis=0)               # (2C+1,)
    inter = sums[:c]
    union = sums[c:2 * c]
    logp_tgt = sums[2 * c]

    n_pix = b * hw                                         # real pixels only
    ce_loss = -logp_tgt / n_pix                            # mean CE over pixels
    dice = (2.0 * inter + smooth) / (union + smooth)       # per-class dice
    dice_loss = 1.0 - jnp.mean(dice)
    return alpha * ce_loss + (1.0 - alpha) * dice_loss


def _combined_loss_ref(preds, targets, alpha=0.5, smooth=1.0):
    """Plain-JAX reference matching the PyTorch CombinedLoss forward."""
    logits = preds.astype(jnp.float32)
    c = logits.shape[1]
    logp = jax.nn.log_softmax(logits, axis=1)                 # (B,C,H,W)
    oh = jax.nn.one_hot(targets, c, dtype=jnp.float32)        # (B,H,W,C)
    oh = jnp.transpose(oh, (0, 3, 1, 2))                      # (B,C,H,W)
    ce = -jnp.mean(jnp.sum(oh * logp, axis=1))
    p = jax.nn.softmax(logits, axis=1)
    inter = jnp.sum(p * oh, axis=(0, 2, 3))
    union = jnp.sum(p, axis=(0, 2, 3)) + jnp.sum(oh, axis=(0, 2, 3))
    dice = (2.0 * inter + smooth) / (union + smooth)
    return alpha * ce + (1.0 - alpha) * (1.0 - jnp.mean(dice))


if __name__ == "__main__":
    key = jax.random.PRNGKey(0)
    k_logits, k_tgt = jax.random.split(key)

    B, C, H, W = 2, 4, 16, 16
    preds = jax.random.normal(k_logits, (B, C, H, W), dtype=jnp.float32)
    targets = jax.random.randint(k_tgt, (B, H, W), 0, C, dtype=jnp.int32)

    loss = jax.block_until_ready(combined_loss(preds, targets,
                                               alpha=0.5, smooth=1.0))
    ref = jax.block_until_ready(_combined_loss_ref(preds, targets, 0.5, 1.0))

    # approx=True softmax reciprocal (Dice only) + MXU epilogue -> small
    # relative-error budget.
    assert jnp.allclose(loss, ref, rtol=3e-3, atol=3e-3), (loss, ref)
    print("KERNEL_OK")
</pallas_src>

<mosaic_0001>
module attributes {stable_mosaic.version = 11 : i64} {
  func.func @_combined_loss_kernel(%arg0: i32, %arg1: i32, %arg2: i32, %arg3: memref<1x4x2x128xf32, #tpu.memory_space<vmem>>, %arg4: memref<1x2x128xi16, #tpu.memory_space<vmem>>, %arg5: memref<1x1x9x128xf32, #tpu.memory_space<vmem>>, %arg6: memref<9x2x128xf32, #tpu.memory_space<vmem>>) attributes {dimension_semantics = [#tpu.dimension_semantics<parallel>, #tpu.dimension_semantics<parallel>, #tpu.dimension_semantics<arbitrary>], iteration_bounds = array<i64: 2, 1, 1>, scalar_prefetch = 0 : i64, scratch_operands = 1 : i64, tpu.core_type = #tpu.core_type<tc>, window_params = [{transform_indices = @transform_0, window_bounds = array<i64: 1, 4, 2, 128>}, {transform_indices = @transform_1, window_bounds = array<i64: 1, 2, 128>}, {transform_indices = @transform_2, window_bounds = array<i64: 1, 1, 9, 128>}]} {
    %c0 = arith.constant 0 : index
    %c0_0 = arith.constant 0 : index
    %c0_1 = arith.constant 0 : index
    %c0_2 = arith.constant 0 : index
    %0 = vector.load %arg3[%c0, %c0_0, %c0_1, %c0_2] : memref<1x4x2x128xf32, #tpu.memory_space<vmem>>, vector<1x4x2x128xf32>
    %1 = vector.shape_cast %0 : vector<1x4x2x128xf32> to vector<4x2x128xf32>
    %c0_3 = arith.constant 0 : index
    %c0_4 = arith.constant 0 : index
    %c0_5 = arith.constant 0 : index
    %2 = vector.load %arg4[%c0_3, %c0_4, %c0_5] : memref<1x2x128xi16, #tpu.memory_space<vmem>>, vector<1x2x128xi16>
    %3 = vector.shape_cast %2 : vector<1x2x128xi16> to vector<2x128xi16>
    %4 = arith.extsi %3 : vector<2x128xi16> to vector<2x128xi32>
    %cst = arith.constant dense<0xFF800000> : vector<2x128xf32>
    %5 = vector.multi_reduction <maximumf>, %1, %cst [0] : vector<4x2x128xf32> to vector<2x128xf32>
    %6 = vector.shape_cast %5 : vector<2x128xf32> to vector<1x2x128xf32>
    %7 = vector.broadcast %6 : vector<1x2x128xf32> to vector<4x2x128xf32>
    %8 = arith.subf %1, %7 : vector<4x2x128xf32>
    %9 = math.exp %8 : vector<4x2x128xf32>
    %cst_6 = arith.constant dense<0.000000e+00> : vector<2x128xf32>
    %10 = vector.multi_reduction <add>, %9, %cst_6 [0] : vector<4x2x128xf32> to vector<2x128xf32>
    %11 = vector.shape_cast %10 : vector<2x128xf32> to vector<1x2x128xf32>
    %12 = tpu.reciprocal %11 {approx = true} : vector<1x2x128xf32> -> vector<1x2x128xf32>
    %13 = vector.broadcast %12 : vector<1x2x128xf32> to vector<4x2x128xf32>
    %14 = arith.mulf %9, %13 : vector<4x2x128xf32>
    %15 = tpu.iota {dimensions = array<i32: 0>} : vector<4x1x1xi32>
    %16 = vector.shape_cast %4 : vector<2x128xi32> to vector<1x2x128xi32>
    %17 = vector.broadcast %16 : vector<1x2x128xi32> to vector<4x2x128xi32>
    %18 = vector.broadcast %15 : vector<4x1x1xi32> to vector<4x2x128xi32>
    %19 = arith.cmpi eq, %17, %18 : vector<4x2x128xi32>
    %20 = arith.extui %19 : vector<4x2x128xi1> to vector<4x2x128xi32>
    %21 = arith.sitofp %20 : vector<4x2x128xi32> to vector<4x2x128xf32>
    %22 = arith.mulf %14, %21 : vector<4x2x128xf32>
    %23 = arith.mulf %21, %8 : vector<4x2x128xf32>
    %cst_7 = arith.constant dense<0.000000e+00> : vector<2x128xf32>
    %24 = vector.multi_reduction <add>, %23, %cst_7 [0] : vector<4x2x128xf32> to vector<2x128xf32>
    %25 = vector.shape_cast %24 : vector<2x128xf32> to vector<1x2x128xf32>
    %26 = math.log %11 : vector<1x2x128xf32>
    %27 = arith.subf %25, %26 : vector<1x2x128xf32>
    %28 = arith.addf %14, %21 : vector<4x2x128xf32>
    %c0_i32 = arith.constant 0 : i32
    %29 = arith.cmpi eq, %arg2, %c0_i32 : i32
    %30 = arith.extui %29 : i1 to i32
    %c0_i32_8 = arith.constant 0 : i32
    %31 = arith.cmpi ne, %30, %c0_i32_8 : i32
    scf.if %31 {
      %c0_13 = arith.constant 0 : index
      %c0_14 = arith.constant 0 : index
      %c0_15 = arith.constant 0 : index
      %38 = vector.load %arg6[%c0_13, %c0_14, %c0_15] : memref<9x2x128xf32, #tpu.memory_space<vmem>>, vector<4x2x128xf32>
      tpu.vector_store %arg6[%c0_13, %c0_14, %c0_15], %22 {strides = array<i32>} : memref<9x2x128xf32, #tpu.memory_space<vmem>>, vector<4x2x128xf32>,
      %c4 = arith.constant 4 : index
      %c0_16 = arith.constant 0 : index
      %c0_17 = arith.constant 0 : index
      %39 = vector.load %arg6[%c4, %c0_16, %c0_17] : memref<9x2x128xf32, #tpu.memory_space<vmem>>, vector<4x2x128xf32>
      tpu.vector_store %arg6[%c4, %c0_16, %c0_17], %28 {strides = array<i32>} : memref<9x2x128xf32, #tpu.memory_space<vmem>>, vector<4x2x128xf32>,
      %c8 = arith.constant 8 : index
      %c0_18 = arith.constant 0 : index
      %c0_19 = arith.constant 0 : index
      %40 = vector.load %arg6[%c8, %c0_18, %c0_19] : memref<9x2x128xf32, #tpu.memory_space<vmem>>, vector<1x2x128xf32>
      tpu.vector_store %arg6[%c8, %c0_18, %c0_19], %27 {strides = array<i32>} : memref<9x2x128xf32, #tpu.memory_space<vmem>>, vector<1x2x128xf32>,
    } else {
    }
    %c0_i32_9 = arith.constant 0 : i32
    %32 = arith.cmpi ne, %arg2, %c0_i32_9 : i32
    %33 = arith.extui %32 : i1 to i32
    %c0_i32_10 = arith.constant 0 : i32
    %34 = arith.cmpi ne, %33, %c0_i32_10 : i32
    scf.if %34 {
      %c0_13 = arith.constant 0 : index
      %c0_14 = arith.constant 0 : index
      %c0_15 = arith.constant 0 : index
      %38 = vector.load %arg6[%c0_13, %c0_14, %c0_15] : memref<9x2x128xf32, #tpu.memory_space<vmem>>, vector<4x2x128xf32>
      %39 = arith.addf %38, %22 : vector<4x2x128xf32>
      %c0_16 = arith.constant 0 : index
      %c0_17 = arith.constant 0 : index
      %c0_18 = arith.constant 0 : index
      %40 = vector.load %arg6[%c0_16, %c0_17, %c0_18] : memref<9x2x128xf32, #tpu.memory_space<vmem>>, vector<4x2x128xf32>
      tpu.vector_store %arg6[%c0_16, %c0_17, %c0_18], %39 {strides = array<i32>} : memref<9x2x128xf32, #tpu.memory_space<vmem>>, vector<4x2x128xf32>,
      %c4 = arith.constant 4 : index
      %c0_19 = arith.constant 0 : index
      %c0_20 = arith.constant 0 : index
      %41 = vector.load %arg6[%c4, %c0_19, %c0_20] : memref<9x2x128xf32, #tpu.memory_space<vmem>>, vector<4x2x128xf32>
      %42 = arith.addf %41, %28 : vector<4x2x128xf32>
      %c4_21 = arith.constant 4 : index
      %c0_22 = arith.constant 0 : index
      %c0_23 = arith.constant 0 : index
      %43 = vector.load %arg6[%c4_21, %c0_22, %c0_23] : memref<9x2x128xf32, #tpu.memory_space<vmem>>, vector<4x2x128xf32>
      tpu.vector_store %arg6[%c4_21, %c0_22, %c0_23], %42 {strides = array<i32>} : memref<9x2x128xf32, #tpu.memory_space<vmem>>, vector<4x2x128xf32>,
      %c8 = arith.constant 8 : index
      %c0_24 = arith.constant 0 : index
      %c0_25 = arith.constant 0 : index
      %44 = vector.load %arg6[%c8, %c0_24, %c0_25] : memref<9x2x128xf32, #tpu.memory_space<vmem>>, vector<1x2x128xf32>
      %45 = arith.addf %44, %27 : vector<1x2x128xf32>
      %c8_26 = arith.constant 8 : index
      %c0_27 = arith.constant 0 : index
      %c0_28 = arith.constant 0 : index
      %46 = vector.load %arg6[%c8_26, %c0_27, %c0_28] : memref<9x2x128xf32, #tpu.memory_space<vmem>>, vector<1x2x128xf32>
      tpu.vector_store %arg6[%c8_26, %c0_27, %c0_28], %45 {strides = array<i32>} : memref<9x2x128xf32, #tpu.memory_space<vmem>>, vector<1x2x128xf32>,
    } else {
    }
    %c0_i32_11 = arith.constant 0 : i32
    %35 = arith.cmpi eq, %arg2, %c0_i32_11 : i32
    %36 = arith.extui %35 : i1 to i32
    %c0_i32_12 = arith.constant 0 : i32
    %37 = arith.cmpi ne, %36, %c0_i32_12 : i32
    scf.if %37 {
      %c0_13 = arith.constant 0 : index
      %c0_14 = arith.constant 0 : index
      %c0_15 = arith.constant 0 : index
      %38 = vector.load %arg6[%c0_13, %c0_14, %c0_15] : memref<9x2x128xf32, #tpu.memory_space<vmem>>, vector<9x2x128xf32>
      %cst_16 = arith.constant dense<0.000000e+00> : vector<9x128xf32>
      %39 = vector.multi_reduction <add>, %38, %cst_16 [1] : vector<9x2x128xf32> to vector<9x128xf32>
      %cst_17 = arith.constant 1.000000e+00 : f32
      %40 = vector.broadcast %cst_17 : f32 to vector<128x128xf32>
      %cst_18 = arith.constant dense<0.000000e+00> : vector<9x128xf32>
      %41 = tpu.matmul %39, %40, %cst_18 {dimension_numbers = #tpu.dot_dimension_numbers<[1], [0], [0], [1], [0, 0, 1, 1], [], []>} : vector<9x128xf32>, vector<128x128xf32>, vector<9x128xf32> -> vector<9x128xf32>
      %42 = vector.shape_cast %41 : vector<9x128xf32> to vector<1x1x9x128xf32>
      %c0_19 = arith.constant 0 : index
      %c0_20 = arith.constant 0 : index
      %c0_21 = arith.constant 0 : index
      %c0_22 = arith.constant 0 : index
      %43 = vector.load %arg5[%c0_19, %c0_20, %c0_21, %c0_22] : memref<1x1x9x128xf32, #tpu.memory_space<vmem>>, vector<1x1x9x128xf32>
      tpu.vector_store %arg5[%c0_19, %c0_20, %c0_21, %c0_22], %42 {strides = array<i32>} : memref<1x1x9x128xf32, #tpu.memory_space<vmem>>, vector<1x1x9x128xf32>,
    } else {
    }
    return
  }
  func.func @transform_0(%arg0: i32, %arg1: i32, %arg2: i32) -> (i32, i32, i32, i32) {
    %c1_i32 = arith.constant 1 : i32
    %0 = arith.muli %arg1, %c1_i32 : i32
    %1 = arith.addi %0, %arg2 : i32
    %c0_i32 = arith.constant 0 : i32
    %c0_i32_0 = arith.constant 0 : i32
    %c0_i32_1 = arith.constant 0 : i32
    return %arg0, %c0_i32, %1, %c0_i32_0 : i32, i32, i32, i32
  }
  func.func @transform_1(%arg0: i32, %arg1: i32, %arg2: i32) -> (i32, i32, i32) {
    %c1_i32 = arith.constant 1 : i32
    %0 = arith.muli %arg1, %c1_i32 : i32
    %1 = arith.addi %0, %arg2 : i32
    %c0_i32 = arith.constant 0 : i32
    %c0_i32_0 = arith.constant 0 : i32
    return %arg0, %1, %c0_i32 : i32, i32, i32
  }
  func.func @transform_2(%arg0: i32, %arg1: i32, %arg2: i32) -> (i32, i32, i32, i32) {
    %c1_i32 = arith.constant 1 : i32
    %0 = arith.muli %arg0, %c1_i32 : i32
    %1 = arith.addi %0, %arg1 : i32
    %c0_i32 = arith.constant 0 : i32
    %c0_i32_0 = arith.constant 0 : i32
    %c0_i32_1 = arith.constant 0 : i32
    %c0_i32_2 = arith.constant 0 : i32
    return %1, %c0_i32, %c0_i32_0, %c0_i32_1 : i32, i32, i32, i32
  }
}

</mosaic_0001>

<llo_original>
// kernel: tpu_custom_call.1
$region0: #{tpu_custom_call.1}
  #allocation0 [shape = 'u32[]', space=smem, size = 0x4, offset = 0x4, fixed_abs, tag = 'smem constant byte address 0x4 - core index']
  #allocation1 [shape = 'u32[72,128]{1,0:T(1,128)}', space=vmem, size = 0x9000, scoped, tag = 'internal scratch']
  #allocation2 [shape = 'f32[9,2,128]{2,1,0:T(2,128)}', space=vmem, size = 0x2400, scoped, tag = 'scratch operand']
  %s0 = inlined_call_operand.hbm [shape: f32[2,4,2,128], index: 0, kind: input, shape index: {}]
  %s1 = inlined_call_operand.hbm [shape: s16[2,2,128], index: 1, kind: input, shape index: {}]
  %s2 = inlined_call_operand.vmem [shape: f32[2,1,9,128], index: 2, kind: output, shape index: {}]
  %s3 = sld [smem:[#allocation0]]
  $region61: #{tpu_custom_call.1} parent=0
    _
  %s5 = ssub.s32 1, %s3
  %s6 = scalar_select 0, %s5, %s3
  $region1: #{tpu_custom_call.1} parent=0
    #allocation3 [shape = 'u8[8192]{0}', space=vmem, size = 0x2000, scoped, tag = 'input window, operand 0']
    #allocation4 [shape = 's32[2]{0}', space=sflag, size = 0x8, scoped, tag = 'scoped memory for tpu_custom_call.1']
    #allocation5 [shape = 'u8[1024]{0}', space=vmem, size = 0x400, scoped, tag = 'input window, operand 1']
    #allocation6 [shape = 's32[2]{0}', space=sflag, size = 0x8, scoped, tag = 'scoped memory for tpu_custom_call.1']
    %7 = vsyncpa [#allocation4], 0
    %s8 = scalar_lea.sflag [#allocation4], 1
    %9 = vsyncpa %s8, 0
    %10 = vsyncpa [#allocation6], 0
    %s11 = scalar_lea.sflag [#allocation6], 1
    %12 = vsyncpa %s11, 0
    loop: start=0, step=1, limit=4
    $region2: #{tpu_custom_call.1} parent=1 // loop_pre_header
      _
    $region3: #{tpu_custom_call.1} parent=1 // loop_header
      %s14 = sphi 0, %s18
      %p15 = scmp.ge.s32.totalorder %s14, 4
      %s21 = sphi 0, %s40
      %s22 = sphi 0, %s36
      %s23 = sphi 0, %s32
      %s24 = sphi 0, %s21
      %s25 = sphi 0, %s22
      %s26 = sphi 0, %s23
      %s27 = sphi 0, %s24
      %s28 = sphi 0, %s25
      %s29 = sphi 0, %s26
      %s47 = sphi 0, %s49
      %s50 = sphi 0, %s47
      %s51 = sphi 0, %s50
      %s67 = sphi 0, %s51
      %s77 = sphi 0, %s79
      %s80 = sphi 0, %s77
      %s81 = sphi 0, %s80
      %s97 = sphi 0, %s81
      %s105 = sphi 0, %s107
      %s108 = sphi 0, %s105
      %s109 = sphi 0, %s108
      %s125 = sphi 0, %s109
    $region4: #{tpu_custom_call.1} parent=1 // loop_header_branch
      %17 = sbr.rel (%p15) target = $region8
    $region5: #{tpu_custom_call.1} parent=1 // loop_body
      %s19 = ssub.s32 %s14, 1
      %s20 = ssub.s32 %s14, 2
      %s30 = sadd.s32 1, %s23
      %p31 = scmp.ge.s32.totalorder %s30, 1
      %s32 = scalar_select %p31, 0, %s30
      %s33 = sadd.s32 1, %s22
      %s34 = scalar_select %p31, %s33, %s22
      %p35 = scmp.ge.s32.totalorder %s34, 1
      %s36 = scalar_select %p35, 0, %s34
      %s37 = sadd.s32 1, %s21
      %s38 = scalar_select %p35, %s37, %s21
      %p39 = scmp.ge.s32.totalorder %s38, 2
      %s40 = scalar_select %p39, 0, %s38
      %s41 = sadd.s32 %s22, %s23
      %s42 = sadd.s32 %s36, %s32
      %s43 = ssub.s32 %s21, %s40
      %s44 = ssub.s32 %s41, %s42
      %s45 = sor.u32 %s43, %s44
      %p46 = scmp.eq.s32.totalorder %s45, 0
      %s48 = sadd.s32 %s47, 1
      %s49 = scalar_select %p46, %s47, %s48
      %p52 = pneg %p46
      %p53 = scmp.eq.s32.totalorder %s14, 1
      %p54 = por %p52, %p53
      %p55 = scmp.ne.s32.totalorder %s47, %s50
      %p56 = scmp.eq.s32.totalorder %s14, 0
      %p57 = por %p55, %p56
      %p58 = scmp.ne.s32.totalorder %s47, %s50
      %p59 = scmp.eq.s32.totalorder %s19, 1
      %p60 = por %p58, %p59
      %p61 = scmp.ne.s32.totalorder %s50, %s51
      %p62 = scmp.eq.s32.totalorder %s19, 0
      %p63 = por %p61, %p62
      %p64 = scmp.ne.s32.totalorder %s50, %s51
      %p65 = scmp.eq.s32.totalorder %s20, 1
      %p66 = por %p64, %p65
      %p68 = scmp.ne.s32.totalorder %s51, %s67
      %p69 = scmp.eq.s32.totalorder %s20, 0
      %p70 = por %p68, %p69
      %s71 = sadd.s32 %s22, %s23
      %s72 = sadd.s32 %s36, %s32
      %s73 = ssub.s32 %s21, %s40
      %s74 = ssub.s32 %s71, %s72
      %s75 = sor.u32 %s73, %s74
      %p76 = scmp.eq.s32.totalorder %s75, 0
      %s78 = sadd.s32 %s77, 1
      %s79 = scalar_select %p76, %s77, %s78
      %p82 = pneg %p76
      %p83 = scmp.eq.s32.totalorder %s14, 1
      %p84 = por %p82, %p83
      %p85 = scmp.ne.s32.totalorder %s77, %s80
      %p86 = scmp.eq.s32.totalorder %s14, 0
      %p87 = por %p85, %p86
      %p88 = scmp.ne.s32.totalorder %s77, %s80
      %p89 = scmp.eq.s32.totalorder %s19, 1
      %p90 = por %p88, %p89
      %p91 = scmp.ne.s32.totalorder %s80, %s81
      %p92 = scmp.eq.s32.totalorder %s19, 0
      %p93 = por %p91, %p92
      %p94 = scmp.ne.s32.totalorder %s80, %s81
      %p95 = scmp.eq.s32.totalorder %s20, 1
      %p96 = por %p94, %p95
      %p98 = scmp.ne.s32.totalorder %s81, %s97
      %p99 = scmp.eq.s32.totalorder %s20, 0
      %p100 = por %p98, %p99
      %s101 = sadd.s32 %s21, %s22
      %s102 = sadd.s32 %s40, %s36
      %s103 = ssub.s32 %s101, %s102
      %p104 = scmp.eq.s32.totalorder %s103, 0
      %s106 = sadd.s32 %s105, 1
      %s107 = scalar_select %p104, %s105, %s106
      %p110 = pneg %p104
      %p111 = scmp.eq.s32.totalorder %s14, 1
      %p112 = por %p110, %p111
      %p113 = scmp.ne.s32.totalorder %s105, %s108
      %p114 = scmp.eq.s32.totalorder %s14, 0
      %p115 = por %p113, %p114
      %p116 = scmp.ne.s32.totalorder %s105, %s108
      %p117 = scmp.eq.s32.totalorder %s19, 1
      %p118 = por %p116, %p117
      %p119 = scmp.ne.s32.totalorder %s108, %s109
      %p120 = scmp.eq.s32.totalorder %s19, 0
      %p121 = por %p119, %p120
      %p122 = scmp.ne.s32.totalorder %s108, %s109
      %p123 = scmp.eq.s32.totalorder %s20, 1
      %p124 = por %p122, %p123
      %p126 = scmp.ne.s32.totalorder %s109, %s125
      %p127 = scmp.eq.s32.totalorder %s20, 0
      %p128 = por %p126, %p127
      %p129 = scmp.le.s32.totalorder 1, %s14
      %p130 = scmp.lt.s32.totalorder %s14, 3
      %p131 = pnand %p129, %p130
      %p132 = pneg %p131
      // Predicated region
      $region9: #{tpu_custom_call.1} parent=5 // pred_check
        _
      $region10: #{tpu_custom_call.1} parent=5 // pred_check_branch
        %134 = sbr.rel (%p131) target = $region12
      $region11: #{tpu_custom_call.1} parent=5 // pred_region
        %s135 = ssub.s32 %s14, 1
      $region12: #{tpu_custom_call.1} parent=5 // pred_fallthru
        _
      %p136 = scmp.lt.s32.totalorder %s14, 2
      // Predicated region
      $region13: #{tpu_custom_call.1} parent=5 // pred_check
        %p137 = pneg %p136
      $region14: #{tpu_custom_call.1} parent=5 // pred_check_branch
        %139 = sbr.rel (%p137) target = $region16
      $region15: #{tpu_custom_call.1} parent=5 // pred_region
        // Predicated region
        $region17: #{tpu_custom_call.1} parent=15 // pred_check
          %p140 = pneg %p57
        $region18: #{tpu_custom_call.1} parent=15 // pred_check_branch
          %142 = sbr.rel (%p140) target = $region20
        $region19: #{tpu_custom_call.1} parent=15 // pred_region
          %s143 = sand.u32 %s47, 1
          %s144 = scalar_lea.sflag [#allocation4], %s143
          %s145 = sand.u32 %s47, 1
          %s146 = smul.addr %s145, 8
          %s147 = scalar_lea.vmem [#allocation3], %s146
          %s148 = sadd.s32 %s22, %s23
          %150 = vsyncadd %s144, 0
          %s151 = smul.addr %s21, 4
          %s152 = sadd.s32 %s148, %s151
          %s153 = smul.addr %s152, 2
          %s154 = scalar_lea.hbm %s0, %s153
          %s155 = sshll.u32 %s154, 4
          %s156 = int_to_ptr.hbm [resolvable:$true] %s155
          %s157 = sshll.u32 %s147, 4
          %s158 = int_to_ptr.vmem [resolvable:$true] %s157
          %163 = dma.hbm_to_vmem [thread:$0]  %s156, 128, %s158, %s144, 32, 32, 2
        $region20: #{tpu_custom_call.1} parent=15 // pred_fallthru
          _
        // Predicated region
        $region21: #{tpu_custom_call.1} parent=15 // pred_check
          %p164 = pneg %p87
        $region22: #{tpu_custom_call.1} parent=15 // pred_check_branch
          %166 = sbr.rel (%p164) target = $region24
        $region23: #{tpu_custom_call.1} parent=15 // pred_region
          %s167 = sand.u32 %s77, 1
          %s168 = scalar_lea.sflag [#allocation6], %s167
          %s169 = sand.u32 %s77, 1
          %s170 = scalar_lea.vmem [#allocation5], %s169
          %s171 = sadd.s32 %s22, %s23
          %173 = vsyncadd %s168, 0
          %s174 = sadd.s32 %s171, %s21
          %s175 = scalar_lea.hbm %s1, %s174
          %s177 = sshll.u32 %s175, 4
          %s178 = int_to_ptr.hbm [resolvable:$true] %s177
          %s179 = sshll.u32 %s170, 4
          %s180 = int_to_ptr.vmem [resolvable:$true] %s179
          %182 = dma.hbm_to_vmem [thread:$0]  %s178, 16, %s180, %s168
        $region24: #{tpu_custom_call.1} parent=15 // pred_fallthru
          _
      $region16: #{tpu_custom_call.1} parent=5 // pred_fallthru
        _
      %p183 = scmp.le.s32.totalorder 1, %s14
      %p184 = scmp.lt.s32.totalorder %s14, 3
      %p185 = pnand %p183, %p184
      %p186 = pneg %p185
      // Predicated region
      $region25: #{tpu_custom_call.1} parent=5 // pred_check
        _
      $region26: #{tpu_custom_call.1} parent=5 // pred_check_branch
        %188 = sbr.rel (%p185) target = $region28
      $region27: #{tpu_custom_call.1} parent=5 // pred_region
        %s189 = ssub.s32 %s14, 1
        %s190 = sand.u32 %s50, 1
        %s191 = scalar_lea.sflag [#allocation4], %s190
        %s192 = sand.u32 %s50, 1
        %s193 = smul.addr %s192, 8
        %s194 = scalar_lea.vmem [#allocation3], %s193
        // Predicated region
        $region29: #{tpu_custom_call.1} parent=27 // pred_check
          %p195 = pneg %p63
        $region30: #{tpu_custom_call.1} parent=27 // pred_check_branch
          %197 = sbr.rel (%p195) target = $region32
        $region31: #{tpu_custom_call.1} parent=27 // pred_region
          %199 = dma.done %s191, 128
        $region32: #{tpu_custom_call.1} parent=27 // pred_fallthru
          _
        %s200 = sand.u32 %s80, 1
        %s201 = scalar_lea.sflag [#allocation6], %s200
        %s202 = sand.u32 %s80, 1
        %s203 = scalar_lea.vmem [#allocation5], %s202
        // Predicated region
        $region33: #{tpu_custom_call.1} parent=27 // pred_check
          %p204 = pneg %p93
        $region34: #{tpu_custom_call.1} parent=27 // pred_check_branch
          %206 = sbr.rel (%p204) target = $region36
        $region35: #{tpu_custom_call.1} parent=27 // pred_region
          %208 = dma.done %s201, 16
        $region36: #{tpu_custom_call.1} parent=27 // pred_fallthru
          _
        %s209 = sand.u32 %s50, 1
        %s210 = scalar_lea.sflag [#allocation4], %s209
        %s211 = sand.u32 %s50, 1
        %s212 = smul.addr %s211, 8
        %s213 = scalar_lea.vmem [#allocation3], %s212
        %p214 = pneg %p63
        %p215 = pneg %p60
        %s216 = sand.u32 %s80, 1
        %s217 = scalar_lea.sflag [#allocation6], %s216
        %s218 = sand.u32 %s80, 1
        %s219 = scalar_lea.vmem [#allocation5], %s218
        %p220 = pneg %p93
        %p221 = pneg %p90
        %p222 = pneg %p121
        %p223 = pneg %p118
        %s224 = sadd.s32 %s24, %s25
        %p225 = scmp.lt.s32.totalorder %s224, 1
        %s226 = scalar_select %p225, %s224, 1
        %s227 = smul.addr %s226, 2
        %s228 = smul.addr %s227, 8
        %s229 = scalar_lea.vmem %s2, %s228
        %s230 = sadd.s32 %s25, %s26
        %s231 = sadd.s32 %s25, %s26
        %s232 = sadd.s32 %s24, %s25
        %p233 = scmp.lt.s32.totalorder %s232, 1
        %s234 = scalar_select %p233, %s232, 1
        %s235 = smul.addr %s234, 2
        %s236 = smul.addr %s235, 8
        %s237 = scalar_lea.vmem %s2, %s236
        %s238 = sadd.s32 %s24, %s25
        %v239 = vld [vmem:[%s194] sm:$0x3]
        %v240 = vld [vmem:[%s194 + $0x2] sm:$0x3]
        %v241 = vld [vmem:[%s194 + $0x4] sm:$0x3]
        %v242 = vld [vmem:[%s194 + $0x6] sm:$0x3]
        %v243 = vld [vmem:[%s203] sm:$0x1]
        %v244 = vunpack.c.l.b16 %v243
        %vm245 = vcmask 1041408
        %v246 = vsel %vm245, %v239, -inf
        %v247 = vsel %vm245, %v240, -inf
        %v248 = vsel %vm245, %v241, -inf
        %v249 = vsel %vm245, %v242, -inf
        %v250 = vmax.f32 %v246, %v247
        %v251 = vmax.f32 %v248, %v249
        %v252 = vmax.f32 %v250, %v251
        %v253 = vsub.f32 %v239, %v252
        %v254 = vsub.f32 %v240, %v252
        %v255 = vsub.f32 %v241, %v252
        %v256 = vsub.f32 %v242, %v252
        %v257 = vmul.f32 %v253, 1.442695
        %v258 = vpow.pop %v257
        %v259 = vmul.f32 %v254, 1.442695
        %v260 = vpow.pop %v259
        %v261 = vmul.f32 %v255, 1.442695
        %v262 = vpow.pop %v261
        %v263 = vmul.f32 %v256, 1.442695
        %v264 = vpow.pop %v263
        %v265 = vsel %vm245, %v258, 0.0
        %v266 = vsel %vm245, %v260, 0.0
        %v267 = vadd.f32 %v265, %v266
        %v268 = vsel %vm245, %v262, 0.0
        %v269 = vadd.f32 %v267, %v268
        %v270 = vsel %vm245, %v264, 0.0
        %v271 = vadd.f32 %v269, %v270
        %v272 = vrcp.pop %v271
        %v273 = vmul.f32 %v258, %v272
        %v274 = vmul.f32 %v260, %v272
        %v275 = vmul.f32 %v262, %v272
        %v276 = vmul.f32 %v264, %v272
        %vm277 = vcmp.eq.s32.totalorder %v244, 0
        %vm278 = vcmp.eq.s32.totalorder %v244, 1
        %vm279 = vcmp.eq.s32.totalorder %v244, 2
        %vm280 = vcmp.eq.s32.totalorder %v244, 3
        %v281 = vsel %vm277, 1, 0
        %v282 = vsel %vm278, 1, 0
        %v283 = vsel %vm279, 1, 0
        %v284 = vsel %vm280, 1, 0
        %v285 = vcvt.s32.f32 %v281
        %v286 = vcvt.s32.f32 %v282
        %v287 = vcvt.s32.f32 %v283
        %v288 = vcvt.s32.f32 %v284
        %v289 = vmul.f32 %v273, %v285
        %v290 = vmul.f32 %v274, %v286
        %v291 = vmul.f32 %v275, %v287
        %v292 = vmul.f32 %v276, %v288
        %v293 = vmul.f32 %v285, %v253
        %v294 = vmul.f32 %v286, %v254
        %v295 = vmul.f32 %v287, %v255
        %v296 = vmul.f32 %v288, %v256
        %v297 = vsel %vm245, %v293, 0.0
        %v298 = vsel %vm245, %v294, 0.0
        %v299 = vadd.f32 %v297, %v298
        %v300 = vsel %vm245, %v295, 0.0
        %v301 = vadd.f32 %v299, %v300
        %v302 = vsel %vm245, %v296, 0.0
        %v303 = vadd.f32 %v301, %v302
        %v304 = vlog2.pop %v271
        %v305 = vmul.f32 %v304, 0.6931472
        %v306 = vsub.f32 %v303, %v305
        %v307 = vadd.f32 %v273, %v285
        %v308 = vadd.f32 %v274, %v286
        %v309 = vadd.f32 %v275, %v287
        %v310 = vadd.f32 %v276, %v288
        %p311 = scmp.eq.s32.totalorder %s26, 0
        // Predicated region
        $region37: #{tpu_custom_call.1} parent=27 // pred_check
          %p312 = pneg %p311
        $region38: #{tpu_custom_call.1} parent=27 // pred_check_branch
          %314 = sbr.rel (%p312) target = $region40
        $region39: #{tpu_custom_call.1} parent=27 // pred_region
          %315 = vst [vmem:[#allocation2] sm:$0x3] %v289
          %316 = vst [vmem:[#allocation2 + $0x2] sm:$0x3] %v290
          %317 = vst [vmem:[#allocation2 + $0x4] sm:$0x3] %v291
          %318 = vst [vmem:[#allocation2 + $0x6] sm:$0x3] %v292
          %s319 = scalar_lea.vmem [#allocation2], 8
          %320 = vst [vmem:[%s319] sm:$0x3] %v307
          %321 = vst [vmem:[%s319 + $0x2] sm:$0x3] %v308
          %322 = vst [vmem:[%s319 + $0x4] sm:$0x3] %v309
          %323 = vst [vmem:[%s319 + $0x6] sm:$0x3] %v310
          %s324 = scalar_lea.vmem [#allocation2], 16
          %325 = vst [vmem:[%s324] sm:$0x3] %v306
        $region40: #{tpu_custom_call.1} parent=27 // pred_fallthru
          _
        %p326 = scmp.ne.s32.totalorder %s26, 0
        // Predicated region
        $region41: #{tpu_custom_call.1} parent=27 // pred_check
          %p327 = pneg %p326
        $region42: #{tpu_custom_call.1} parent=27 // pred_check_branch
          %329 = sbr.rel (%p327) target = $region44
        $region43: #{tpu_custom_call.1} parent=27 // pred_region
          %v330 = vld [vmem:[#allocation2] sm:$0x3]
          %v331 = vld [vmem:[#allocation2 + $0x2] sm:$0x3]
          %v332 = vld [vmem:[#allocation2 + $0x4] sm:$0x3]
          %v333 = vld [vmem:[#allocation2 + $0x6] sm:$0x3]
          %v334 = vadd.f32 %v330, %v289
          %v335 = vadd.f32 %v331, %v290
          %v336 = vadd.f32 %v332, %v291
          %v337 = vadd.f32 %v333, %v292
          %338 = vst [vmem:[#allocation2] sm:$0x3] %v334
          %339 = vst [vmem:[#allocation2 + $0x2] sm:$0x3] %v335
          %340 = vst [vmem:[#allocation2 + $0x4] sm:$0x3] %v336
          %341 = vst [vmem:[#allocation2 + $0x6] sm:$0x3] %v337
          %s342 = scalar_lea.vmem [#allocation2], 8
          %v343 = vld [vmem:[%s342] sm:$0x3]
          %v344 = vld [vmem:[%s342 + $0x2] sm:$0x3]
          %v345 = vld [vmem:[%s342 + $0x4] sm:$0x3]
          %v346 = vld [vmem:[%s342 + $0x6] sm:$0x3]
          %v347 = vadd.f32 %v343, %v307
          %v348 = vadd.f32 %v344, %v308
          %v349 = vadd.f32 %v345, %v309
          %v350 = vadd.f32 %v346, %v310
          %351 = vst [vmem:[%s342] sm:$0x3] %v347
          %352 = vst [vmem:[%s342 + $0x2] sm:$0x3] %v348
          %353 = vst [vmem:[%s342 + $0x4] sm:$0x3] %v349
          %354 = vst [vmem:[%s342 + $0x6] sm:$0x3] %v350
          %s355 = scalar_lea.vmem [#allocation2], 16
          %v356 = vld [vmem:[%s355] sm:$0x3]
          %v357 = vadd.f32 %v356, %v306
          %358 = vst [vmem:[%s355] sm:$0x3] %v357
        $region44: #{tpu_custom_call.1} parent=27 // pred_fallthru
          _
        // Predicated region
        $region45: #{tpu_custom_call.1} parent=27 // pred_check
          %p359 = pneg %p311
        $region46: #{tpu_custom_call.1} parent=27 // pred_check_branch
          %361 = sbr.rel (%p359) target = $region48
        $region47: #{tpu_custom_call.1} parent=27 // pred_region
          %v362 = vld [vmem:[#allocation2] sm:$0x3]
          %v363 = vld [vmem:[#allocation2 + $0x2] sm:$0x3]
          %v364 = vld [vmem:[#allocation2 + $0x4] sm:$0x3]
          %v365 = vld [vmem:[#allocation2 + $0x6] sm:$0x3]
          %v366 = vld [vmem:[#allocation2 + $0x8] sm:$0x3]
          %v367 = vld [vmem:[#allocation2 + $0xa] sm:$0x3]
          %v368 = vld [vmem:[#allocation2 + $0xc] sm:$0x3]
          %v369 = vld [vmem:[#allocation2 + $0xe] sm:$0x3]
          %v370 = vld [vmem:[#allocation2 + $0x10] sm:$0x3]
          %v371 = vsel %vm245, %v362, 0.0
          %v372 = vrot.slane %v371, 4
          %v373 = vadd.f32 %v371, %v372
          %v374 = vrot.slane %v373, 2
          %v375 = vadd.f32 %v373, %v374
          %v376 = vrot.slane %v375, 1
          %v377 = vadd.f32 %v375, %v376
          %v378 = vsel %vm245, %v363, 0.0
          %v379 = vrot.slane %v378, 4
          %v380 = vadd.f32 %v378, %v379
          %v381 = vrot.slane %v380, 2
          %v382 = vadd.f32 %v380, %v381
          %v383 = vrot.slane %v382, 1
          %v384 = vadd.f32 %v382, %v383
          %v385 = vsel %vm245, %v364, 0.0
          %v386 = vrot.slane %v385, 4
          %v387 = vadd.f32 %v385, %v386
          %v388 = vrot.slane %v387, 2
          %v389 = vadd.f32 %v387, %v388
          %v390 = vrot.slane %v389, 1
          %v391 = vadd.f32 %v389, %v390
          %v392 = vsel %vm245, %v365, 0.0
          %v393 = vrot.slane %v392, 4
          %v394 = vadd.f32 %v392, %v393
          %v395 = vrot.slane %v394, 2
          %v396 = vadd.f32 %v394, %v395
          %v397 = vrot.slane %v396, 1
          %v398 = vadd.f32 %v396, %v397
          %v399 = vsel %vm245, %v366, 0.0
          %v400 = vrot.slane %v399, 4
          %v401 = vadd.f32 %v399, %v400
          %v402 = vrot.slane %v401, 2
          %v403 = vadd.f32 %v401, %v402
          %v404 = vrot.slane %v403, 1
          %v405 = vadd.f32 %v403, %v404
          %v406 = vsel %vm245, %v367, 0.0
          %v407 = vrot.slane %v406, 4
          %v408 = vadd.f32 %v406, %v407
          %v409 = vrot.slane %v408, 2
          %v410 = vadd.f32 %v408, %v409
          %v411 = vrot.slane %v410, 1
          %v412 = vadd.f32 %v410, %v411
          %v413 = vsel %vm245, %v368, 0.0
          %v414 = vrot.slane %v413, 4
          %v415 = vadd.f32 %v413, %v414
          %v416 = vrot.slane %v415, 2
          %v417 = vadd.f32 %v415, %v416
          %v418 = vrot.slane %v417, 1
          %v419 = vadd.f32 %v417, %v418
          %v420 = vsel %vm245, %v369, 0.0
          %v421 = vrot.slane %v420, 4
          %v422 = vadd.f32 %v420, %v421
          %v423 = vrot.slane %v422, 2
          %v424 = vadd.f32 %v422, %v423
          %v425 = vrot.slane %v424, 1
          %v426 = vadd.f32 %v424, %v425
          %v427 = vsel %vm245, %v370, 0.0
          %v428 = vrot.slane %v427, 4
          %v429 = vadd.f32 %v427, %v428
          %v430 = vrot.slane %v429, 2
          %v431 = vadd.f32 %v429, %v430
          %v432 = vrot.slane %v431, 1
          %v433 = vadd.f32 %v431, %v432
          %vm443 = vcmask 1041409
          %v444 = vsel %vm443, %v384, %v377
          %vm445 = vcmask 1042434
          %v446 = vsel %vm445, %v391, %v444
          %vm447 = vcmask 1043459
          %v448 = vsel %vm447, %v398, %v446
          %vm449 = vcmask 1044484
          %v450 = vsel %vm449, %v405, %v448
          %vm451 = vcmask 1045509
          %v452 = vsel %vm451, %v412, %v450
          %vm453 = vcmask 1046534
          %v454 = vsel %vm453, %v419, %v452
          %vm455 = vcmask 1047559
          %v456 = vsel %vm455, %v426, %v454
          %459 = vmatpush.msra.mxu0 1.0
          %460 = vmatpush.msra.mxu0 1.0
          %461 = vmatpush.msra.mxu0 1.0
          %462 = vmatpush.msra.mxu0 1.0
          %463 = vmatpush.msra.mxu0 1.0
          %464 = vmatpush.msra.mxu0 1.0
          %465 = vmatpush.msra.mxu0 1.0
          %466 = vmatpush.msra.mxu0 1.0
          %467 = vmatpush.msra.mxu0 1.0
          %468 = vmatpush.msra.mxu0 1.0
          %469 = vmatpush.msra.mxu0 1.0
          %470 = vmatpush.msra.mxu0 1.0
          %471 = vmatpush.msra.mxu0 1.0
          %472 = vmatpush.msra.mxu0 1.0
          %473 = vmatpush.msra.mxu0 1.0
          %474 = vmatpush.msra.mxu0 1.0
          %475 = vmatmul.f32.gmra.mxu0 %v456
          %v476 = vpop.f32.mrf.mxu0
          %v477 = vadd.f32 0.0, %v476
          %478 = vmatmul.f32.gmra.mxu0 %v433
          %v479 = vpop.f32.mrf.mxu0
          %v480 = vadd.f32 0.0, %v479
          %481 = vdwg.mxu0
          %482 = vst [vmem:[%s237] sm:$0xff] %v477
          %483 = vst [vmem:[%s237 + $0x8] sm:$0x1] %v480
        $region48: #{tpu_custom_call.1} parent=27 // pred_fallthru
          _
        %s484 = sadd.s32 %s24, %s25
        %p485 = scmp.lt.s32.totalorder %s484, 1
        %s486 = scalar_select %p485, %s484, 1
        %s487 = smul.addr %s486, 2
        %s488 = smul.addr %s487, 8
        %s489 = scalar_lea.vmem %s2, %s488
        // Predicated region
        $region49: #{tpu_custom_call.1} parent=27 // pred_check
          %p490 = pneg %p118
        $region50: #{tpu_custom_call.1} parent=27 // pred_check_branch
          %492 = sbr.rel (%p490) target = $region52
        $region51: #{tpu_custom_call.1} parent=27 // pred_region
          %s493 = sadd.s32 %s24, %s25
        $region52: #{tpu_custom_call.1} parent=27 // pred_fallthru
          _
      $region28: #{tpu_custom_call.1} parent=5 // pred_fallthru
        _
      %p494 = scmp.le.s32.totalorder 2, %s14
      // Predicated region
      $region53: #{tpu_custom_call.1} parent=5 // pred_check
        %p495 = pneg %p494
      $region54: #{tpu_custom_call.1} parent=5 // pred_check_branch
        %497 = sbr.rel (%p495) target = $region56
      $region55: #{tpu_custom_call.1} parent=5 // pred_region
        %s498 = ssub.s32 %s14, 2
        // Predicated region
        $region57: #{tpu_custom_call.1} parent=55 // pred_check
          %p499 = pneg %p124
        $region58: #{tpu_custom_call.1} parent=55 // pred_check_branch
          %501 = sbr.rel (%p499) target = $region60
        $region59: #{tpu_custom_call.1} parent=55 // pred_region
          %s502 = sadd.s32 %s27, %s28
          %p503 = scmp.lt.s32.totalorder %s502, 1
          %s504 = scalar_select %p503, %s502, 1
          %s505 = smul.addr %s504, 2
          %s506 = smul.addr %s505, 8
          %s507 = scalar_lea.vmem %s2, %s506
        $region60: #{tpu_custom_call.1} parent=55 // pred_fallthru
          _
      $region56: #{tpu_custom_call.1} parent=5 // pred_fallthru
        _
    $region6: #{tpu_custom_call.1} parent=1 // loop_footer
      %s18 = sadd.s32 1, %s14
    $region7: #{tpu_custom_call.1} parent=1 // loop_footer_branch
      %13 = sbr.rel target = $region3
    $region8: #{tpu_custom_call.1} parent=1 // loop_exit
      _
    %508 = vsyncpa [#allocation4], 1
    %s509 = scalar_lea.sflag [#allocation4], 1
    %510 = vsyncpa %s509, 1
    %511 = vsyncpa [#allocation6], 1
    %s512 = scalar_lea.sflag [#allocation6], 1
    %513 = vsyncpa %s512, 1

</llo_original>
